<compile_context>
chip_gen: v7x
topology: tpu7x:2x2x1
jax: 0.10.0
libtpu: 0.0.40
codegen_flags: <defaults>
</compile_context>

<pallas_src>
import jax
import jax.numpy as jnp
from jax.experimental import pallas as pl
from jax.experimental.pallas import tpu as pltpu

_LANE = 128
_SUBLANE = 8
_VMEM_BUDGET = 32 << 20   # total per-step footprint target; safe on v5e/v6e/v7x


def _vmem_bytes(bb, np_, d, hp, x_itemsize, w_itemsize):
    """Honest per-step VMEM footprint: 2x-buffered x block, f32 intermediate h,
    2x-buffered output block, single-buffered weights."""
    x_blk = bb * np_ * d * x_itemsize
    h_tmp = bb * np_ * hp * 4
    out_blk = bb * np_ * 4
    weights = d * hp * w_itemsize + 2 * hp * 4
    return 2 * x_blk + h_tmp + 2 * out_blk + weights


def _pick_block_b(B, Np, D, Hp, x_itemsize, w_itemsize):
    """Batch-block size Bb: a multiple of 8 dividing B, or B itself (the only
    other layout-legal choice for the (Bb, Np) output block)."""
    cands = sorted({bb for bb in range(8, B, 8) if B % bb == 0} | {B})
    fitting = [bb for bb in cands
               if _vmem_bytes(bb, Np, D, Hp, x_itemsize, w_itemsize) <= _VMEM_BUDGET]
    if not fitting:
        fitting = [min(cands)]
    # Keep grid length >= 2 whenever B admits it: lets the single "parallel"
    # axis shard across v7x's two TensorCores and keeps the pipeline busy.
    multi = [bb for bb in fitting if bb < B] or fitting
    # Prefer the smallest block that already gives the MXU a deep M dimension
    # (>= 512 rows) and a >= 2 MiB input tile (~85% of HBM roofline measured);
    # otherwise take the largest fitting block.
    good = [bb for bb in multi
            if bb * Np >= 512 and bb * Np * D * x_itemsize >= (2 << 20)]
    return min(good) if good else max(multi)


def _const_spec(shape):
    """BlockSpec for an operand whose block index is constant across the grid.
    Single-buffer it (Buffered(1)) when the JAX version supports pipeline_mode;
    double-buffering a constant tile only doubles its VMEM footprint."""
    index_map = lambda *_: (0,) * len(shape)
    if hasattr(pl, "Buffered"):
        try:
            return pl.BlockSpec(shape, index_map, pipeline_mode=pl.Buffered(1))
        except TypeError:
            pass
    return pl.BlockSpec(shape, index_map)


def _make_kernel(n_valid, compute_dtype):
    def kernel(x_ref, w1_ref, b1_ref, w2_ref, o_ref):
        """x: (Bb, Np, D); w1: (D, Hp); b1, w2: (1, Hp); out: (Bb, Np) f32."""
        Bb, Np, D = x_ref.shape
        Hp = w1_ref.shape[1]

        # One big MXU matmul over all Bb*Np rows of this block (weights are
        # shared across rows).  Np is a multiple of 8, so the reshape is a
        # free re-view.  Cast to the compute dtype here (not in the wrapper)
        # so x is never re-materialized in HBM.
        x2 = x_ref[...].reshape(Bb * Np, D).astype(compute_dtype)
        h = jnp.dot(x2, w1_ref[...], preferred_element_type=jnp.float32)   # (Bb*Np, Hp)
        h = jnp.maximum(h + b1_ref[...], 0.0)                              # f32, VPU

        # Second Linear has a single output column: VPU multiply + lane (XLU)
        # reduction over H instead of pushing a 1-column result through MXU.
        # b2 is omitted: softmax over N is invariant to a per-row scalar shift.
        s = jnp.sum(h.reshape(Bb, Np, Hp) * w2_ref[...], axis=-1)          # (Bb, Np)

        if n_valid != Np:   # mask zero-padded sequence positions (exact)
            col = jax.lax.broadcasted_iota(jnp.int32, (Bb, Np), 1)
            s = jnp.where(col < n_valid, s, -jnp.inf)

        # Softmax over the sequence axis (lane axis here).  Exact divide so the
        # weights sum to 1 to f32 precision.
        m = jnp.max(s, axis=-1, keepdims=True)
        e = jnp.exp(s - m)
        o_ref[...] = (e / jnp.sum(e, axis=-1, keepdims=True)).astype(o_ref.dtype)

    return kernel


def reconstruction_attention(x, w1, b1, w2, b2=None, *, compute_dtype=jnp.bfloat16):
    """Forward pass of ReconstructionAttention.

    x: (B, N, D).  w1: (D, D//2), b1: (D//2,), w2: (D//2, 1), b2: (1,).
    (PyTorch nn.Linear stores weight as (out, in); pass the transposed (in, out)
    layout so the kernel computes x @ W + b.)  b2 is accepted for API parity
    but unused: softmax over N is invariant to a per-row scalar shift.
    Returns softmax-over-N attention weights of shape (B, N, 1), float32.
    """
    del b2
    B, N, D = x.shape
    H = w1.shape[1]

    # Zero-pad H to a lane multiple (exactly preserves the result).
    Hp = -(-H // _LANE) * _LANE
    if Hp != H:
        w1 = jnp.pad(w1, ((0, 0), (0, Hp - H)))
        b1 = jnp.pad(b1, ((0, Hp - H),))
        w2 = jnp.pad(w2, ((0, Hp - H), (0, 0)))

    # Zero-pad N to a sublane multiple so in-kernel reshapes are free re-views;
    # padded rows are masked to -inf in the kernel before the softmax.
    Np = -(-N // _SUBLANE) * _SUBLANE
    if Np != N:
        x = jnp.pad(x, ((0, 0), (0, Np - N), (0, 0)))

    # x stays in its producer dtype (a wrapper-side astype would force XLA to
    # write a converted copy back to HBM); the kernel casts right before jnp.dot.
    w1c = w1.astype(compute_dtype)                    # params are tiny; cheap cast
    b1_2d = b1.reshape(1, Hp).astype(jnp.float32)
    w2_row = w2.reshape(1, Hp).astype(jnp.float32)

    x_isz = jnp.dtype(x.dtype).itemsize
    w_isz = jnp.dtype(compute_dtype).itemsize
    Bb = _pick_block_b(B, Np, D, Hp, x_isz, w_isz)
    grid = (B // Bb,)

    vmem_need = _vmem_bytes(Bb, Np, D, Hp, x_isz, w_isz)
    vmem_limit = min(64 << 20, max(int(vmem_need * 1.25), 32 << 20))

    cost = pl.CostEstimate(
        flops=2 * B * Np * D * Hp + 3 * B * Np * Hp + 5 * B * Np,
        transcendentals=B * Np,
        bytes_accessed=(x.size * x_isz
                        + w1c.size * w_isz
                        + (b1_2d.size + w2_row.size) * 4
                        + B * Np * 4),
    )

    out = pl.pallas_call(
        _make_kernel(N, compute_dtype),
        out_shape=jax.ShapeDtypeStruct((B, Np), jnp.float32),
        grid_spec=pltpu.PrefetchScalarGridSpec(
            num_scalar_prefetch=0,
            grid=grid,
            in_specs=[
                pl.BlockSpec((Bb, Np, D), lambda b: (b, 0, 0)),
                _const_spec((D, Hp)),
                _const_spec((1, Hp)),
                _const_spec((1, Hp)),
            ],
            out_specs=pl.BlockSpec((Bb, Np), lambda b: (b, 0)),
        ),
        compiler_params=pltpu.CompilerParams(
            dimension_semantics=("parallel",),
            vmem_limit_bytes=vmem_limit),
        cost_estimate=cost,
    )(x, w1c, b1_2d, w2_row)

    return out[:, :N].reshape(B, N, 1)


def _reference(x, w1, b1, w2, b2):
    h = jnp.maximum(jnp.einsum("bnd,dh->bnh", x, w1) + b1, 0.0)
    s = jnp.einsum("bnh,ho->bno", h, w2) + b2
    return jax.nn.softmax(s, axis=1)


if __name__ == "__main__":
    # Small shapes consistent with the module: batch=2, seq=8, feature_dim=32.
    B, N, D = 2, 8, 32
    H = D // 2

    key = jax.random.PRNGKey(0)
    kx, kw1, kb1, kw2, kb2 = jax.random.split(key, 5)

    x = jax.random.normal(kx, (B, N, D), dtype=jnp.float32)
    w1 = jax.random.normal(kw1, (D, H), dtype=jnp.float32) * (1.0 / jnp.sqrt(D))
    b1 = jax.random.normal(kb1, (H,), dtype=jnp.float32) * 0.01
    w2 = jax.random.normal(kw2, (H, 1), dtype=jnp.float32) * (1.0 / jnp.sqrt(H))
    b2 = jax.random.normal(kb2, (1,), dtype=jnp.float32) * 0.01

    ref = _reference(x, w1, b1, w2, b2)

    # Exact f32 compute path.
    out_f32 = reconstruction_attention(x, w1, b1, w2, b2, compute_dtype=jnp.float32)
    out_f32 = jax.block_until_ready(out_f32)
    assert out_f32.shape == (B, N, 1)
    assert jnp.allclose(out_f32, ref, atol=2e-3, rtol=2e-3), "f32 mismatch vs reference"
    assert jnp.allclose(jnp.sum(out_f32, axis=1), 1.0, atol=1e-4), "weights do not sum to 1"

    # Default bf16 matmul path (HBM/MXU lever on v5e/v6e/v7x); bias/ReLU/softmax
    # stay f32 and the softmax uses an exact divide, so weights still sum to 1.
    out_bf16 = reconstruction_attention(x, w1, b1, w2, b2)
    out_bf16 = jax.block_until_ready(out_bf16)
    assert out_bf16.shape == (B, N, 1)
    assert jnp.allclose(out_bf16, ref, atol=8e-2, rtol=8e-2), "bf16 mismatch vs reference"
    assert jnp.allclose(jnp.sum(out_bf16, axis=1), 1.0, atol=1e-4), "weights do not sum to 1"

    print("KERNEL_OK")
</pallas_src>

<mosaic_0001>
module attributes {stable_mosaic.version = 11 : i64} {
  func.func @kernel(%arg0: i32, %arg1: memref<2x8x32xf32, #tpu.memory_space<vmem>>, %arg2: memref<32x128xf32, #tpu.memory_space<vmem>>, %arg3: memref<1x128xf32, #tpu.memory_space<vmem>>, %arg4: memref<1x128xf32, #tpu.memory_space<vmem>>, %arg5: memref<2x8xf32, #tpu.memory_space<vmem>>) attributes {dimension_semantics = [#tpu.dimension_semantics<parallel>], iteration_bounds = array<i64: 1>, scalar_prefetch = 0 : i64, scratch_operands = 0 : i64, tpu.core_type = #tpu.core_type<tc>, window_params = [{transform_indices = @transform_0, window_bounds = array<i64: 2, 8, 32>}, {pipeline_mode = #tpu.pipeline_mode<synchronous>, transform_indices = @transform_1, window_bounds = array<i64: 32, 128>}, {pipeline_mode = #tpu.pipeline_mode<synchronous>, transform_indices = @transform_2, window_bounds = array<i64: 1, 128>}, {pipeline_mode = #tpu.pipeline_mode<synchronous>, transform_indices = @transform_3, window_bounds = array<i64: 1, 128>}, {transform_indices = @transform_4, window_bounds = array<i64: 2, 8>}]} {
    %c0 = arith.constant 0 : index
    %c0_0 = arith.constant 0 : index
    %c0_1 = arith.constant 0 : index
    %0 = vector.load %arg1[%c0, %c0_0, %c0_1] : memref<2x8x32xf32, #tpu.memory_space<vmem>>, vector<2x8x32xf32>
    %1 = vector.shape_cast %0 : vector<2x8x32xf32> to vector<16x32xf32>
    %c0_2 = arith.constant 0 : index
    %c0_3 = arith.constant 0 : index
    %2 = vector.load %arg2[%c0_2, %c0_3] : memref<32x128xf32, #tpu.memory_space<vmem>>, vector<32x128xf32>
    %cst = arith.constant dense<0.000000e+00> : vector<16x128xf32>
    %3 = tpu.matmul %1, %2, %cst {dimension_numbers = #tpu.dot_dimension_numbers<[1], [0], [0], [1], [0, 0, 1, 1], [], []>} : vector<16x32xf32>, vector<32x128xf32>, vector<16x128xf32> -> vector<16x128xf32>
    %c0_4 = arith.constant 0 : index
    %c0_5 = arith.constant 0 : index
    %4 = vector.load %arg3[%c0_4, %c0_5] : memref<1x128xf32, #tpu.memory_space<vmem>>, vector<1x128xf32>
    %5 = vector.broadcast %4 : vector<1x128xf32> to vector<16x128xf32>
    %6 = arith.addf %3, %5 : vector<16x128xf32>
    %cst_6 = arith.constant 0.000000e+00 : f32
    %7 = vector.broadcast %cst_6 : f32 to vector<16x128xf32>
    %8 = arith.maximumf %6, %7 : vector<16x128xf32>
    %9 = vector.shape_cast %8 : vector<16x128xf32> to vector<2x8x128xf32>
    %c0_7 = arith.constant 0 : index
    %c0_8 = arith.constant 0 : index
    %10 = vector.load %arg4[%c0_7, %c0_8] : memref<1x128xf32, #tpu.memory_space<vmem>>, vector<1x128xf32>
    %11 = vector.shape_cast %10 : vector<1x128xf32> to vector<1x1x128xf32>
    %12 = vector.broadcast %11 : vector<1x1x128xf32> to vector<2x8x128xf32>
    %13 = arith.mulf %9, %12 : vector<2x8x128xf32>
    %cst_9 = arith.constant dense<0.000000e+00> : vector<2x8xf32>
    %14 = vector.multi_reduction <add>, %13, %cst_9 [2] : vector<2x8x128xf32> to vector<2x8xf32>
    %cst_10 = arith.constant dense<0xFF800000> : vector<2xf32>
    %15 = vector.multi_reduction <maximumf>, %14, %cst_10 [1] : vector<2x8xf32> to vector<2xf32>
    %16 = vector.shape_cast %15 : vector<2xf32> to vector<2x1xf32>
    %17 = vector.broadcast %16 : vector<2x1xf32> to vector<2x8xf32>
    %18 = arith.subf %14, %17 : vector<2x8xf32>
    %19 = math.exp %18 : vector<2x8xf32>
    %cst_11 = arith.constant dense<0.000000e+00> : vector<2xf32>
    %20 = vector.multi_reduction <add>, %19, %cst_11 [1] : vector<2x8xf32> to vector<2xf32>
    %21 = vector.shape_cast %20 : vector<2xf32> to vector<2x1xf32>
    %22 = vector.broadcast %21 : vector<2x1xf32> to vector<2x8xf32>
    %23 = arith.divf %19, %22 : vector<2x8xf32>
    %c0_12 = arith.constant 0 : index
    %c0_13 = arith.constant 0 : index
    %24 = vector.load %arg5[%c0_12, %c0_13] : memref<2x8xf32, #tpu.memory_space<vmem>>, vector<2x8xf32>
    tpu.vector_store %arg5[%c0_12, %c0_13], %23 {strides = array<i32>} : memref<2x8xf32, #tpu.memory_space<vmem>>, vector<2x8xf32>,
    return
  }
  func.func @transform_0(%arg0: i32) -> (i32, i32, i32) {
    %c0_i32 = arith.constant 0 : i32
    %c0_i32_0 = arith.constant 0 : i32
    %c0_i32_1 = arith.constant 0 : i32
    return %arg0, %c0_i32, %c0_i32_0 : i32, i32, i32
  }
  func.func @transform_1(%arg0: i32) -> (i32, i32) {
    %c0_i32 = arith.constant 0 : i32
    %c0_i32_0 = arith.constant 0 : i32
    %c0_i32_1 = arith.constant 0 : i32
    return %c0_i32, %c0_i32_0 : i32, i32
  }
  func.func @transform_2(%arg0: i32) -> (i32, i32) {
    %c0_i32 = arith.constant 0 : i32
    %c0_i32_0 = arith.constant 0 : i32
    %c0_i32_1 = arith.constant 0 : i32
    return %c0_i32, %c0_i32_0 : i32, i32
  }
  func.func @transform_3(%arg0: i32) -> (i32, i32) {
    %c0_i32 = arith.constant 0 : i32
    %c0_i32_0 = arith.constant 0 : i32
    %c0_i32_1 = arith.constant 0 : i32
    return %c0_i32, %c0_i32_0 : i32, i32
  }
  func.func @transform_4(%arg0: i32) -> (i32, i32) {
    %c0_i32 = arith.constant 0 : i32
    %c0_i32_0 = arith.constant 0 : i32
    return %arg0, %c0_i32 : i32, i32
  }
}

</mosaic_0001>

<llo_original>
// kernel: tpu_custom_call.1
$region0: #{tpu_custom_call.1}
  #allocation0 [shape = 'u32[]', space=smem, size = 0x4, offset = 0x4, fixed_abs, tag = 'smem constant byte address 0x4 - core index']
  #allocation1 [shape = 'u32[144,128]{1,0:T(1,128)}', space=vmem, size = 0x12000, scoped, tag = 'internal scratch']
  %s0 = inlined_call_operand.hbm [shape: f32[2,8,32], index: 0, kind: input, shape index: {}]
  %s1 = inlined_call_operand.hbm [shape: f32[32,128], index: 1, kind: input, shape index: {}]
  %s2 = inlined_call_operand.vmem [shape: f32[1,128], index: 2, kind: input, shape index: {}]
  %s3 = inlined_call_operand.vmem [shape: f32[1,128], index: 3, kind: input, shape index: {}]
  %s4 = inlined_call_operand.hbm [shape: f32[2,8], index: 4, kind: output, shape index: {}]
  %s5 = sld [smem:[#allocation0]]
  $region34: #{tpu_custom_call.1} parent=0
    _
  %s7 = ssub.s32 1, %s5
  %s8 = scalar_select 0, %s7, %s5
  $region1: #{tpu_custom_call.1} parent=0
    #allocation2 [shape = 'u8[8192]{0}', space=vmem, size = 0x2000, scoped, tag = 'input window, operand 0, single buffered']
    #allocation3 [shape = 's32[1]{0}', space=sflag, size = 0x4, scoped, tag = 'scoped memory for tpu_custom_call.1']
    #allocation4 [shape = 's32[1]{0}', space=sflag, size = 0x4, scoped, tag = 'scoped memory for tpu_custom_call.1']
    #allocation5 [shape = 'u8[16384]{0}', space=vmem, size = 0x4000, scoped, tag = 'input window, operand 1, single buffered']
    #allocation6 [shape = 's32[1]{0}', space=sflag, size = 0x4, scoped, tag = 'scoped memory for tpu_custom_call.1']
    #allocation7 [shape = 'u8[1024]{0}', space=vmem, size = 0x400, scoped, tag = 'output window, operand 0, single buffered']
    %9 = vsyncpa [#allocation3], 0
    %10 = vsyncpa [#allocation6], 0
    %11 = vsyncpa [#allocation4], 0
    // Predicated region
    $region2: #{tpu_custom_call.1} parent=1 // pred_check
      _
    $region3: #{tpu_custom_call.1} parent=1 // pred_check_branch
      %13 = sbr.rel (0) target = $region5
    $region4: #{tpu_custom_call.1} parent=1 // pred_region
      %s15 = ssub.s32 256, 256
      %16 = vsyncadd [#allocation3], %s15
      %s17 = sshll.u32 [#allocation2], 4
      %s18 = int_to_ptr.vmem [resolvable:$true] %s17
      %23 = dma.hbm_to_vmem [thread:$0]  %s0, 256, %s18, [#allocation3], 128, 128, 8
    $region5: #{tpu_custom_call.1} parent=1 // pred_fallthru
      _
    // Predicated region
    $region6: #{tpu_custom_call.1} parent=1 // pred_check
      _
    $region7: #{tpu_custom_call.1} parent=1 // pred_check_branch
      %25 = sbr.rel (0) target = $region9
    $region8: #{tpu_custom_call.1} parent=1 // pred_region
      %s27 = ssub.s32 512, 512
      %28 = vsyncadd [#allocation6], %s27
      %s29 = sshll.u32 [#allocation5], 4
      %s30 = int_to_ptr.vmem [resolvable:$true] %s29
      %35 = dma.hbm_to_vmem [thread:$0]  %s1, 512, %s30, [#allocation6], 128, 128, 8
    $region9: #{tpu_custom_call.1} parent=1 // pred_fallthru
      _
    // Predicated region
    $region10: #{tpu_custom_call.1} parent=1 // pred_check
      _
    $region11: #{tpu_custom_call.1} parent=1 // pred_check_branch
      %37 = sbr.rel (0) target = $region13
    $region12: #{tpu_custom_call.1} parent=1 // pred_region
      _
    $region13: #{tpu_custom_call.1} parent=1 // pred_fallthru
      _
    // Predicated region
    $region14: #{tpu_custom_call.1} parent=1 // pred_check
      _
    $region15: #{tpu_custom_call.1} parent=1 // pred_check_branch
      %39 = sbr.rel (0) target = $region17
    $region16: #{tpu_custom_call.1} parent=1 // pred_region
      _
    $region17: #{tpu_custom_call.1} parent=1 // pred_fallthru
      _
    // Predicated region
    $region18: #{tpu_custom_call.1} parent=1 // pred_check
      _
    $region19: #{tpu_custom_call.1} parent=1 // pred_check_branch
      %41 = sbr.rel (0) target = $region21
    $region20: #{tpu_custom_call.1} parent=1 // pred_region
      %42 = dma.done [#allocation3], 256
    $region21: #{tpu_custom_call.1} parent=1 // pred_fallthru
      _
    // Predicated region
    $region22: #{tpu_custom_call.1} parent=1 // pred_check
      _
    $region23: #{tpu_custom_call.1} parent=1 // pred_check_branch
      %44 = sbr.rel (0) target = $region25
    $region24: #{tpu_custom_call.1} parent=1 // pred_region
      %45 = dma.done [#allocation6], 512
    $region25: #{tpu_custom_call.1} parent=1 // pred_fallthru
      _
    %v46 = vld [vmem:[#allocation2] sm:$0xff]
    %v47 = vld [vmem:[#allocation2 + $0x8] sm:$0xff]
    %v48 = vld [vmem:[#allocation5] sm:$0xff]
    %v49 = vld [vmem:[#allocation5 + $0x8] sm:$0xff]
    %v50 = vld [vmem:[#allocation5 + $0x10] sm:$0xff]
    %v51 = vld [vmem:[#allocation5 + $0x18] sm:$0xff]
    %v52 = vld [vmem:[%s2] sm:$0x1]
    %v54 = vlaneseq
    %v55 = vshrl.u32 %v54, 7
    %v56 = vsub.s32 0, %v55
    %v57 = vrot.slane %v52, %v56
    %vm59 = vcmask 261120
    %v61 = vsel %vm59, %v46, 0
    %v64 = vsel %vm59, %v47, 0
    %66 = vmatprep.subr.mxu0 0.0
    %67 = vmatpush1.msra.mxu0 %v48
    %68 = vmatprep.subr.mxu0 0.0
    %69 = vmatpush1.msra.mxu0 %v49
    %70 = vmatprep.subr.mxu0 0.0
    %71 = vmatpush1.msra.mxu0 %v50
    %72 = vmatprep.subr.mxu0 0.0
    %73 = vmatpush1.msra.mxu0 %v51
    %74 = vmatprep.subr.mxu0 0.0
    %75 = vmatpush1.msra.mxu0 0.0
    %76 = vmatprep.subr.mxu0 0.0
    %77 = vmatpush1.msra.mxu0 0.0
    %78 = vmatprep.subr.mxu0 0.0
    %79 = vmatpush1.msra.mxu0 0.0
    %80 = vmatprep.subr.mxu0 0.0
    %81 = vmatpush1.msra.mxu0 0.0
    %82 = vmatprep.subr.mxu0 0.0
    %83 = vmatpush1.msra.mxu0 0.0
    %84 = vmatprep.subr.mxu0 0.0
    %85 = vmatpush1.msra.mxu0 0.0
    %86 = vmatprep.subr.mxu0 0.0
    %87 = vmatpush1.msra.mxu0 0.0
    %88 = vmatprep.subr.mxu0 0.0
    %89 = vmatpush1.msra.mxu0 0.0
    %90 = vmatprep.subr.mxu0 0.0
    %91 = vmatpush1.msra.mxu0 0.0
    %92 = vmatprep.subr.mxu0 0.0
    %93 = vmatpush1.msra.mxu0 0.0
    %94 = vmatprep.subr.mxu0 0.0
    %95 = vmatpush1.msra.mxu0 0.0
    %96 = vmatprep.subr.mxu0 0.0
    %97 = vmatpush1.msra.mxu0 0.0
    %98 = vmatprep.subr.mxu0 0.0
    %99 = vmatpush1.msra.mxu0 0.0
    %100 = vmatprep.subr.mxu0 0.0
    %101 = vmatpush1.msra.mxu0 0.0
    %102 = vmatprep.subr.mxu0 0.0
    %103 = vmatpush1.msra.mxu0 0.0
    %104 = vmatprep.subr.mxu0 0.0
    %105 = vmatpush1.msra.mxu0 0.0
    %106 = vmatprep.subr.mxu0 0.0
    %107 = vmatpush1.msra.mxu0 0.0
    %108 = vmatprep.subr.mxu0 0.0
    %109 = vmatpush1.msra.mxu0 0.0
    %110 = vmatprep.subr.mxu0 0.0
    %111 = vmatpush1.msra.mxu0 0.0
    %112 = vmatprep.subr.mxu0 0.0
    %113 = vmatpush1.msra.mxu0 0.0
    %114 = vmatprep.subr.mxu0 0.0
    %115 = vmatpush1.msra.mxu0 0.0
    %116 = vmatprep.subr.mxu0 0.0
    %117 = vmatpush1.msra.mxu0 0.0
    %118 = vmatprep.subr.mxu0 0.0
    %119 = vmatpush1.msra.mxu0 0.0
    %120 = vmatprep.subr.mxu0 0.0
    %121 = vmatpush1.msra.mxu0 0.0
    %122 = vmatprep.subr.mxu0 0.0
    %123 = vmatpush1.msra.mxu0 0.0
    %124 = vmatprep.subr.mxu0 0.0
    %125 = vmatpush1.msra.mxu0 0.0
    %126 = vmatprep.subr.mxu0 0.0
    %127 = vmatpush1.msra.mxu0 0.0
    %128 = vmatprep.subr.mxu0 0.0
    %129 = vmatpush1.msra.mxu0 0.0
    %130 = vmatprep.mubr.f32.mxu0 0.0
    %131 = vmatmul.mubr.f32.gmra.mrb[0].mxu0 %v61
    %v132 = vpop.f32.mrb[0].mxu0
    %v133 = vadd.f32 %v57, %v132
    %v134 = vpop.f32.mrb[0].mxu0
    %135 = vmatprep.mubr.f32.mxu0 0.0
    %136 = vmatmul.mubr.f32.gmra.mrb[0].mxu0 %v64
    %v137 = vpop.f32.mrb[0].mxu0
    %v138 = vadd.f32 %v57, %v137
    %v139 = vpop.f32.mrb[0].mxu0
    %140 = vdwg.mxu0
    %v141 = vmax.f32 %v133, 0.0
    %v142 = vmax.f32 %v138, 0.0
    %v143 = vld [vmem:[%s3] sm:$0x1]
    %v145 = vlaneseq
    %v146 = vshrl.u32 %v145, 7
    %v147 = vsub.s32 0, %v146
    %v148 = vrot.slane %v143, %v147
    %v150 = vmul.f32 %v141, %v148
    %v151 = vmul.f32 %v142, %v148
    %152 = vadd.xlane.f32.xlu0 %v150
    %v153 = vpop.xlane.xlu0 %152
    %154 = vadd.xlane.f32.xlu0 %v151
    %v155 = vpop.xlane.xlu0 %154
    %v158 = vlaneseq
    %v159 = vand.u32 %v158, 127
    %v160 = vlaneseq
    %v161 = vshrl.u32 %v160, 7
    %v162 = vsub.s32 %v159, %v161
    %v163 = vrot.slane %v153, %v162
    %v164 = vlaneseq
    %v165 = vshrl.u32 %v164, 7
    %v166 = vsub.s32 %v159, %v165
    %v167 = vrot.slane %v155, %v166
    %vm168 = vcmask 1041409
    %v169 = vsel %vm168, %v167, %v163
    %vm171 = vcmask 58368
    %v172 = vsel %vm171, %v169, -inf
    %173 = vmax.xlane.f32.xlu0 %v172
    %v174 = vpop.xlane.xlu0 %173
    %v176 = vlaneseq
    %v177 = vshrl.u32 %v176, 7
    %v178 = vsub.s32 0, %v177
    %v179 = vrot.slane %v174, %v178
    %v180 = vlaneseq
    %v181 = vshrl.u32 %v180, 7
    %v182 = vsub.s32 1, %v181
    %v183 = vrot.slane %v174, %v182
    %v186 = vsub.f32 %v153, %v179
    %v187 = vsub.f32 %v155, %v183
    %v188 = vmul.f32 %v186, 1.442695
    %v189 = vpow.pop %v188
    %v190 = vmul.f32 %v187, 1.442695
    %v191 = vpow.pop %v190
    %194 = vset.pattern.permute.xlu0 0
    %195 = vperm.xlu0 %194, %v189
    %v196 = vpop.permute.xlu0 %195
    %197 = vset.pattern.permute.xlu0 0
    %198 = vperm.xlu0 %197, %v191
    %v199 = vpop.permute.xlu0 %198
    %v200 = vlaneseq
    %v201 = vshrl.u32 %v200, 7
    %v202 = vsub.s32 %v159, %v201
    %v203 = vrot.slane %v196, %v202
    %v204 = vlaneseq
    %v205 = vshrl.u32 %v204, 7
    %v206 = vsub.s32 %v159, %v205
    %v207 = vrot.slane %v199, %v206
    %v208 = vsel %vm168, %v207, %v203
    %v210 = vsel %vm171, %v208, 0.0
    %211 = vadd.xlane.f32.xlu0 %v210
    %v212 = vpop.xlane.xlu0 %211
    %v214 = vlaneseq
    %v215 = vshrl.u32 %v214, 7
    %v216 = vsub.s32 0, %v215
    %v217 = vrot.slane %v212, %v216
    %v218 = vlaneseq
    %v219 = vshrl.u32 %v218, 7
    %v220 = vsub.s32 1, %v219
    %v221 = vrot.slane %v212, %v220
    %v224 = vrcp.pop %v217
    %v225 = vmul.f32 %v189, %v224
    %v226 = vrcp.pop %v221
    %v227 = vmul.f32 %v191, %v226
    %230 = vset.pattern.permute.xlu0 0
    %231 = vperm.xlu0 %230, %v225
    %v232 = vpop.permute.xlu0 %231
    %233 = vset.pattern.permute.xlu0 0
    %234 = vperm.xlu0 %233, %v227
    %v235 = vpop.permute.xlu0 %234
    %v236 = vlaneseq
    %v237 = vshrl.u32 %v236, 7
    %v238 = vsub.s32 %v159, %v237
    %v239 = vrot.slane %v232, %v238
    %v240 = vlaneseq
    %v241 = vshrl.u32 %v240, 7
    %v242 = vsub.s32 %v159, %v241
    %v243 = vrot.slane %v235, %v242
    %v244 = vsel %vm168, %v243, %v239
    %246 = vst.msk [vmem:[#allocation7] sm:$0x3] %vm171, %v244
    // Predicated region
    $region26: #{tpu_custom_call.1} parent=1 // pred_check
      _
    $region27: #{tpu_custom_call.1} parent=1 // pred_check_branch
      %248 = sbr.rel (0) target = $region29
    $region28: #{tpu_custom_call.1} parent=1 // pred_region
      %s250 = ssub.s32 32, 32
      %251 = vsyncadd [#allocation4], %s250
      %s253 = sshll.u32 [#allocation7], 4
      %s254 = int_to_ptr.vmem [resolvable:$true] %s253
      %256 = dma.vmem_to_hbm [thread:$0]  %s254, 32, %s4, [#allocation4]
    $region29: #{tpu_custom_call.1} parent=1 // pred_fallthru
      _
    // Predicated region
    $region30: #{tpu_custom_call.1} parent=1 // pred_check
      _
    $region31: #{tpu_custom_call.1} parent=1 // pred_check_branch
      %258 = sbr.rel (0) target = $region33
    $region32: #{tpu_custom_call.1} parent=1 // pred_region
      %259 = dma.done [#allocation4], 32
    $region33: #{tpu_custom_call.1} parent=1 // pred_fallthru
      _
    %260 = vsyncpa [#allocation3], 1
    %261 = vsyncpa [#allocation6], 1
    %262 = vsyncpa [#allocation4], 1

</llo_original>
